<compile_context>
chip_gen: v7x
topology: tpu7x:2x2x1
jax: 0.10.0
libtpu: 0.0.40
codegen_flags: <defaults>
</compile_context>

<pallas_src>
import functools

import jax
import jax.numpy as jnp
from jax.experimental import pallas as pl
from jax.experimental.pallas import tpu as pltpu

_LANE = 128     # lane width of a vreg (last dim)
_SUBLANE = 8    # sublane count of a vreg (second-to-last dim)


def _round_up(v, m):
    return ((v + m - 1) // m) * m


def _fused_mlp_kernel(x_ref, w1_ref, wrest_ref, ball_ref, o_ref, *, num_layers):
    """Fused MLP forward for one batch tile.

    x_ref:     (TILE_M, K0)            input tile (feature dim un-padded)
    w1_ref:    (K0, H_pad)             first-layer weight (output dim padded)
    wrest_ref: (L-1, H_pad, H_pad)     packed weights of layers 2..L
    ball_ref:  (L, 1, H_pad)           packed biases of all layers
    o_ref:     (TILE_M, H_pad)         lane-dense padded output slab
    """
    h = x_ref[...]
    # Layer 0.
    h = jnp.dot(h, w1_ref[...], preferred_element_type=jnp.float32)
    h = h + ball_ref[0]                      # (TILE_M, H) + (1, H) broadcast
    if num_layers > 1:
        h = jnp.maximum(h, 0.0)
    # Layers 1..L-1 (static Python loop; weights indexed with static l).
    for l in range(1, num_layers):
        h = jnp.dot(h, wrest_ref[l - 1], preferred_element_type=jnp.float32)
        h = h + ball_ref[l]
        if l < num_layers - 1:
            h = jnp.maximum(h, 0.0)
    o_ref[...] = h.astype(o_ref.dtype)


def prepare_params(params):
    """One-time padding/packing of parameters (hoisted out of the call path).

    params: list of (w_t, b) with w_t of shape (in_features, out_features)
            (i.e. transpose of PyTorch's Linear weight) and b of shape (out,).

    Returns (packed, meta) where packed = (w1_p, wrest_p, ball_p):
        w1_p:    (K0, H_pad)
        wrest_p: (max(L-1, 1), H_pad, H_pad)
        ball_p:  (L, 1, H_pad)
    All hidden/output dims are zero-padded to a common H_pad (>=128). Padding
    is exact under matmul + bias + ReLU.
    """
    num_layers = len(params)
    k0 = params[0][0].shape[0]
    out_dims = [w.shape[1] for w, _ in params]
    h_pad = max(_round_up(max(out_dims), _LANE), _LANE)
    for w, _ in params[1:]:
        assert w.shape[0] <= h_pad, "hidden input dim exceeds padded width"

    w1, _ = params[0]
    w1_p = jnp.zeros((k0, h_pad), jnp.float32).at[:, : w1.shape[1]].set(w1)

    n_rest = max(num_layers - 1, 1)
    wrest_p = jnp.zeros((n_rest, h_pad, h_pad), jnp.float32)
    for l in range(1, num_layers):
        w, _ = params[l]
        wrest_p = wrest_p.at[l - 1, : w.shape[0], : w.shape[1]].set(w)

    ball_p = jnp.zeros((num_layers, 1, h_pad), jnp.float32)
    for l, (_, b) in enumerate(params):
        ball_p = ball_p.at[l, 0, : b.shape[0]].set(b)

    meta = dict(num_layers=num_layers, k0=k0, h_pad=h_pad, n_out=out_dims[-1])
    return (w1_p, wrest_p, ball_p), meta


def _forward_padded(x, packed, meta, tile_m_cap=512):
    """Runs the fused kernel; returns the padded (M_pad, H_pad) output slab."""
    w1_p, wrest_p, ball_p = packed
    num_layers = meta["num_layers"]
    k0 = meta["k0"]
    h_pad = meta["h_pad"]

    m = x.shape[0]
    assert x.shape[1] == k0, "input feature dim mismatch"

    # Batch padding / tiling. Small batches -> single tile (grid of 1);
    # large batches -> grid over M with tiles of <= tile_m_cap rows
    # ("parallel" axis shards across v7x's two TensorCores and pipelines DMA).
    m_pad = max(_round_up(m, _SUBLANE), _SUBLANE)
    tile_m = m_pad if m_pad <= 2 * tile_m_cap else tile_m_cap
    m_pad = _round_up(m_pad, tile_m)
    if m_pad != m:
        x = jnp.zeros((m_pad, k0), x.dtype).at[:m, :].set(x)
    grid = (m_pad // tile_m,)

    # Advisory cost estimate, using the padded shapes actually DMA'd/computed.
    flops = 2 * m_pad * k0 * h_pad + 2 * m_pad * h_pad * h_pad * (num_layers - 1)
    bytes_accessed = 4 * (
        m_pad * k0 + w1_p.size + wrest_p.size + ball_p.size + m_pad * h_pad
    )

    kernel = functools.partial(_fused_mlp_kernel, num_layers=num_layers)
    out_p = pl.pallas_call(
        kernel,
        out_shape=jax.ShapeDtypeStruct((m_pad, h_pad), jnp.float32),
        grid=grid,
        in_specs=[
            pl.BlockSpec((tile_m, k0), lambda i: (i, 0)),       # x tile
            pl.BlockSpec(w1_p.shape, lambda i: (0, 0)),          # full W1
            pl.BlockSpec(wrest_p.shape, lambda i: (0, 0, 0)),    # packed Ws
            pl.BlockSpec(ball_p.shape, lambda i: (0, 0, 0)),     # packed bs
        ],
        out_specs=pl.BlockSpec((tile_m, h_pad), lambda i: (i, 0)),
        compiler_params=pltpu.CompilerParams(
            dimension_semantics=("parallel",)
        ),
        cost_estimate=pl.CostEstimate(
            flops=flops, transcendentals=0, bytes_accessed=bytes_accessed
        ),
    )(x, w1_p, wrest_p, ball_p)
    return out_p


def make_nnet_forward(params, tile_m_cap=512):
    """Returns a jitted forward fn closing over the pre-padded parameters."""
    packed, meta = prepare_params(params)

    def fwd(x):
        out_p = _forward_padded(x, packed, meta, tile_m_cap)
        # Slice back to the logical shape. A downstream consumer that can work
        # on the padded lane-dense slab may use _forward_padded directly.
        return out_p[: x.shape[0], : meta["n_out"]]

    return jax.jit(fwd)


def nnet_forward_ref(x, params):
    """Pure-JAX reference, mirrors the PyTorch forward exactly."""
    L = len(params)
    for l, (w_t, b) in enumerate(params):
        x = x @ w_t + b
        if l < L - 1:
            x = jnp.maximum(x, 0.0)
    return x


def init_params(key, layers):
    """Deterministic init mimicking nn.Linear default (uniform +/- 1/sqrt(fan_in)).

    Returns list of (w_t, b) where w_t has shape (in_features, out_features),
    i.e. the transpose of PyTorch's (out_features, in_features) weight.
    """
    params = []
    for in_f, out_f in zip(layers, layers[1:]):
        key, kw, kb = jax.random.split(key, 3)
        bound = 1.0 / jnp.sqrt(jnp.float32(in_f))
        w_t = jax.random.uniform(
            kw, (in_f, out_f), jnp.float32, minval=-bound, maxval=bound
        )
        b = jax.random.uniform(
            kb, (out_f,), jnp.float32, minval=-bound, maxval=bound
        )
        params.append((w_t, b))
    return params


if __name__ == "__main__":
    # Spiral-data MLP: 2 input features -> hidden -> hidden -> 3 classes.
    layers = [2, 32, 32, 3]
    batch = 8

    key = jax.random.PRNGKey(0)
    key, kx = jax.random.split(key)
    x = jax.random.normal(kx, (batch, layers[0]), jnp.float32)
    params = init_params(key, layers)

    fwd = make_nnet_forward(params)
    out = jax.block_until_ready(fwd(x))

    ref = nnet_forward_ref(x, params)
    assert out.shape == (batch, layers[-1]), out.shape
    assert jnp.allclose(out, ref, atol=1e-5, rtol=1e-5), "mismatch vs reference"

    print("KERNEL_OK")
</pallas_src>

<mosaic_0001>
module attributes {stable_mosaic.version = 11 : i64} {
  func.func @_fused_mlp_kernel(%arg0: i32, %arg1: memref<8x2xf32, #tpu.memory_space<vmem>>, %arg2: memref<2x128xf32, #tpu.memory_space<vmem>>, %arg3: memref<2x128x128xf32, #tpu.memory_space<vmem>>, %arg4: memref<3x1x128xf32, #tpu.memory_space<vmem>>, %arg5: memref<8x128xf32, #tpu.memory_space<vmem>>) attributes {dimension_semantics = [#tpu.dimension_semantics<parallel>], iteration_bounds = array<i64: 1>, scalar_prefetch = 0 : i64, scratch_operands = 0 : i64, tpu.core_type = #tpu.core_type<tc>, window_params = [{transform_indices = @transform_0, window_bounds = array<i64: 8, 2>}, {pipeline_mode = #tpu.pipeline_mode<synchronous>, transform_indices = @transform_1, window_bounds = array<i64: 2, 128>}, {pipeline_mode = #tpu.pipeline_mode<synchronous>, transform_indices = @transform_2, window_bounds = array<i64: 2, 128, 128>}, {pipeline_mode = #tpu.pipeline_mode<synchronous>, transform_indices = @transform_3, window_bounds = array<i64: 3, 1, 128>}, {transform_indices = @transform_4, window_bounds = array<i64: 8, 128>}]} {
    %c0 = arith.constant 0 : index
    %c0_0 = arith.constant 0 : index
    %0 = vector.load %arg1[%c0, %c0_0] : memref<8x2xf32, #tpu.memory_space<vmem>>, vector<8x2xf32>
    %c0_1 = arith.constant 0 : index
    %c0_2 = arith.constant 0 : index
    %1 = vector.load %arg2[%c0_1, %c0_2] : memref<2x128xf32, #tpu.memory_space<vmem>>, vector<2x128xf32>
    %cst = arith.constant dense<0.000000e+00> : vector<8x128xf32>
    %2 = tpu.matmul %0, %1, %cst {dimension_numbers = #tpu.dot_dimension_numbers<[1], [0], [0], [1], [0, 0, 1, 1], [], []>} : vector<8x2xf32>, vector<2x128xf32>, vector<8x128xf32> -> vector<8x128xf32>
    %c0_3 = arith.constant 0 : index
    %c0_4 = arith.constant 0 : index
    %c0_5 = arith.constant 0 : index
    %3 = vector.load %arg4[%c0_3, %c0_4, %c0_5] : memref<3x1x128xf32, #tpu.memory_space<vmem>>, vector<1x1x128xf32>
    %4 = vector.shape_cast %3 : vector<1x1x128xf32> to vector<1x128xf32>
    %5 = vector.broadcast %4 : vector<1x128xf32> to vector<8x128xf32>
    %6 = arith.addf %2, %5 : vector<8x128xf32>
    %cst_6 = arith.constant 0.000000e+00 : f32
    %7 = vector.broadcast %cst_6 : f32 to vector<8x128xf32>
    %8 = arith.maximumf %6, %7 : vector<8x128xf32>
    %c0_7 = arith.constant 0 : index
    %c0_8 = arith.constant 0 : index
    %c0_9 = arith.constant 0 : index
    %9 = vector.load %arg3[%c0_7, %c0_8, %c0_9] : memref<2x128x128xf32, #tpu.memory_space<vmem>>, vector<1x128x128xf32>
    %10 = vector.shape_cast %9 : vector<1x128x128xf32> to vector<128x128xf32>
    %cst_10 = arith.constant dense<0.000000e+00> : vector<8x128xf32>
    %11 = tpu.matmul %8, %10, %cst_10 {dimension_numbers = #tpu.dot_dimension_numbers<[1], [0], [0], [1], [0, 0, 1, 1], [], []>} : vector<8x128xf32>, vector<128x128xf32>, vector<8x128xf32> -> vector<8x128xf32>
    %c1 = arith.constant 1 : index
    %c0_11 = arith.constant 0 : index
    %c0_12 = arith.constant 0 : index
    %12 = vector.load %arg4[%c1, %c0_11, %c0_12] : memref<3x1x128xf32, #tpu.memory_space<vmem>>, vector<1x1x128xf32>
    %13 = vector.shape_cast %12 : vector<1x1x128xf32> to vector<1x128xf32>
    %14 = vector.broadcast %13 : vector<1x128xf32> to vector<8x128xf32>
    %15 = arith.addf %11, %14 : vector<8x128xf32>
    %cst_13 = arith.constant 0.000000e+00 : f32
    %16 = vector.broadcast %cst_13 : f32 to vector<8x128xf32>
    %17 = arith.maximumf %15, %16 : vector<8x128xf32>
    %c1_14 = arith.constant 1 : index
    %c0_15 = arith.constant 0 : index
    %c0_16 = arith.constant 0 : index
    %18 = vector.load %arg3[%c1_14, %c0_15, %c0_16] : memref<2x128x128xf32, #tpu.memory_space<vmem>>, vector<1x128x128xf32>
    %19 = vector.shape_cast %18 : vector<1x128x128xf32> to vector<128x128xf32>
    %cst_17 = arith.constant dense<0.000000e+00> : vector<8x128xf32>
    %20 = tpu.matmul %17, %19, %cst_17 {dimension_numbers = #tpu.dot_dimension_numbers<[1], [0], [0], [1], [0, 0, 1, 1], [], []>} : vector<8x128xf32>, vector<128x128xf32>, vector<8x128xf32> -> vector<8x128xf32>
    %c2 = arith.constant 2 : index
    %c0_18 = arith.constant 0 : index
    %c0_19 = arith.constant 0 : index
    %21 = vector.load %arg4[%c2, %c0_18, %c0_19] : memref<3x1x128xf32, #tpu.memory_space<vmem>>, vector<1x1x128xf32>
    %22 = vector.shape_cast %21 : vector<1x1x128xf32> to vector<1x128xf32>
    %23 = vector.broadcast %22 : vector<1x128xf32> to vector<8x128xf32>
    %24 = arith.addf %20, %23 : vector<8x128xf32>
    %c0_20 = arith.constant 0 : index
    %c0_21 = arith.constant 0 : index
    %25 = vector.load %arg5[%c0_20, %c0_21] : memref<8x128xf32, #tpu.memory_space<vmem>>, vector<8x128xf32>
    tpu.vector_store %arg5[%c0_20, %c0_21], %24 {strides = array<i32>} : memref<8x128xf32, #tpu.memory_space<vmem>>, vector<8x128xf32>,
    return
  }
  func.func @transform_0(%arg0: i32) -> (i32, i32) {
    %c0_i32 = arith.constant 0 : i32
    %c0_i32_0 = arith.constant 0 : i32
    return %arg0, %c0_i32 : i32, i32
  }
  func.func @transform_1(%arg0: i32) -> (i32, i32) {
    %c0_i32 = arith.constant 0 : i32
    %c0_i32_0 = arith.constant 0 : i32
    %c0_i32_1 = arith.constant 0 : i32
    return %c0_i32, %c0_i32_0 : i32, i32
  }
  func.func @transform_2(%arg0: i32) -> (i32, i32, i32) {
    %c0_i32 = arith.constant 0 : i32
    %c0_i32_0 = arith.constant 0 : i32
    %c0_i32_1 = arith.constant 0 : i32
    %c0_i32_2 = arith.constant 0 : i32
    return %c0_i32, %c0_i32_0, %c0_i32_1 : i32, i32, i32
  }
  func.func @transform_3(%arg0: i32) -> (i32, i32, i32) {
    %c0_i32 = arith.constant 0 : i32
    %c0_i32_0 = arith.constant 0 : i32
    %c0_i32_1 = arith.constant 0 : i32
    %c0_i32_2 = arith.constant 0 : i32
    return %c0_i32, %c0_i32_0, %c0_i32_1 : i32, i32, i32
  }
  func.func @transform_4(%arg0: i32) -> (i32, i32) {
    %c0_i32 = arith.constant 0 : i32
    %c0_i32_0 = arith.constant 0 : i32
    return %arg0, %c0_i32 : i32, i32
  }
}

</mosaic_0001>

<llo_original>
// kernel: fwd.1
$region0: #{fwd.1}
  #allocation0 [shape = 'u32[]', space=smem, size = 0x4, offset = 0x4, fixed_abs, tag = 'smem constant byte address 0x4 - core index']
  #allocation1 [shape = 'u32[144,128]{1,0:T(1,128)}', space=vmem, size = 0x12000, scoped, tag = 'internal scratch']
  %s0 = inlined_call_operand.vmem [shape: f32[8,2], index: 0, kind: input, shape index: {}]
  %s1 = inlined_call_operand.vmem [shape: f32[2,128], index: 1, kind: input, shape index: {}]
  %s2 = inlined_call_operand.hbm [shape: f32[2,128,128], index: 2, kind: input, shape index: {}]
  %s3 = inlined_call_operand.vmem [shape: f32[3,1,128], index: 3, kind: input, shape index: {}]
  %s4 = inlined_call_operand.vmem [shape: f32[8,128], index: 4, kind: output, shape index: {}]
  %s5 = sld [smem:[#allocation0]]
  $region30: #{fwd.1} parent=0
    _
  %s7 = ssub.s32 1, %s5
  %s8 = scalar_select 0, %s7, %s5
  $region1: #{fwd.1} parent=0
    #allocation2 [shape = 'u8[131072]{0}', space=vmem, size = 0x20000, scoped, tag = 'input window, operand 2, single buffered']
    #allocation3 [shape = 's32[1]{0}', space=sflag, size = 0x4, scoped, tag = 'scoped memory for fwd.1']
    %9 = vsyncpa [#allocation3], 0
    // Predicated region
    $region2: #{fwd.1} parent=1 // pred_check
      _
    $region3: #{fwd.1} parent=1 // pred_check_branch
      %11 = sbr.rel (0) target = $region5
    $region4: #{fwd.1} parent=1 // pred_region
      _
    $region5: #{fwd.1} parent=1 // pred_fallthru
      _
    // Predicated region
    $region6: #{fwd.1} parent=1 // pred_check
      _
    $region7: #{fwd.1} parent=1 // pred_check_branch
      %13 = sbr.rel (0) target = $region9
    $region8: #{fwd.1} parent=1 // pred_region
      _
    $region9: #{fwd.1} parent=1 // pred_fallthru
      _
    // Predicated region
    $region10: #{fwd.1} parent=1 // pred_check
      _
    $region11: #{fwd.1} parent=1 // pred_check_branch
      %15 = sbr.rel (0) target = $region13
    $region12: #{fwd.1} parent=1 // pred_region
      %s17 = ssub.s32 4096, 4096
      %18 = vsyncadd [#allocation3], %s17
      %s19 = sshll.u32 [#allocation2], 4
      %s20 = int_to_ptr.vmem [resolvable:$true] %s19
      %25 = dma.hbm_to_vmem [thread:$0]  %s2, 4096, %s20, [#allocation3], 128, 128, 8
    $region13: #{fwd.1} parent=1 // pred_fallthru
      _
    // Predicated region
    $region14: #{fwd.1} parent=1 // pred_check
      _
    $region15: #{fwd.1} parent=1 // pred_check_branch
      %27 = sbr.rel (0) target = $region17
    $region16: #{fwd.1} parent=1 // pred_region
      _
    $region17: #{fwd.1} parent=1 // pred_fallthru
      _
    // Predicated region
    $region18: #{fwd.1} parent=1 // pred_check
      _
    $region19: #{fwd.1} parent=1 // pred_check_branch
      %29 = sbr.rel (0) target = $region21
    $region20: #{fwd.1} parent=1 // pred_region
      %30 = dma.done [#allocation3], 4096
    $region21: #{fwd.1} parent=1 // pred_fallthru
      _
    %v31 = vld [vmem:[%s0] sm:$0xff]
    %v32 = vld [vmem:[%s1] sm:$0x3]
    %v33 = vld [vmem:[%s3] sm:$0x1]
    %v35 = vlaneseq
    %v36 = vshrl.u32 %v35, 7
    %v37 = vsub.s32 0, %v36
    %v38 = vrot.slane %v33, %v37
    %vm40 = vcmask 15360
    %v42 = vsel %vm40, %v31, 0
    %vm44 = vcmask 1041408
    %v46 = vsel %vm44, %v32, 0
    %48 = vmatprep.subr.mxu0 0.0
    %49 = vmatpush1.msra.mxu0 %v46
    %50 = vmatprep.subr.mxu0 0.0
    %51 = vmatpush1.msra.mxu0 0.0
    %52 = vmatprep.subr.mxu0 0.0
    %53 = vmatpush1.msra.mxu0 0.0
    %54 = vmatprep.subr.mxu0 0.0
    %55 = vmatpush1.msra.mxu0 0.0
    %56 = vmatprep.subr.mxu0 0.0
    %57 = vmatpush1.msra.mxu0 0.0
    %58 = vmatprep.subr.mxu0 0.0
    %59 = vmatpush1.msra.mxu0 0.0
    %60 = vmatprep.subr.mxu0 0.0
    %61 = vmatpush1.msra.mxu0 0.0
    %62 = vmatprep.subr.mxu0 0.0
    %63 = vmatpush1.msra.mxu0 0.0
    %64 = vmatprep.subr.mxu0 0.0
    %65 = vmatpush1.msra.mxu0 0.0
    %66 = vmatprep.subr.mxu0 0.0
    %67 = vmatpush1.msra.mxu0 0.0
    %68 = vmatprep.subr.mxu0 0.0
    %69 = vmatpush1.msra.mxu0 0.0
    %70 = vmatprep.subr.mxu0 0.0
    %71 = vmatpush1.msra.mxu0 0.0
    %72 = vmatprep.subr.mxu0 0.0
    %73 = vmatpush1.msra.mxu0 0.0
    %74 = vmatprep.subr.mxu0 0.0
    %75 = vmatpush1.msra.mxu0 0.0
    %76 = vmatprep.subr.mxu0 0.0
    %77 = vmatpush1.msra.mxu0 0.0
    %78 = vmatprep.subr.mxu0 0.0
    %79 = vmatpush1.msra.mxu0 0.0
    %80 = vmatprep.subr.mxu0 0.0
    %81 = vmatpush1.msra.mxu0 0.0
    %82 = vmatprep.subr.mxu0 0.0
    %83 = vmatpush1.msra.mxu0 0.0
    %84 = vmatprep.subr.mxu0 0.0
    %85 = vmatpush1.msra.mxu0 0.0
    %86 = vmatprep.subr.mxu0 0.0
    %87 = vmatpush1.msra.mxu0 0.0
    %88 = vmatprep.subr.mxu0 0.0
    %89 = vmatpush1.msra.mxu0 0.0
    %90 = vmatprep.subr.mxu0 0.0
    %91 = vmatpush1.msra.mxu0 0.0
    %92 = vmatprep.subr.mxu0 0.0
    %93 = vmatpush1.msra.mxu0 0.0
    %94 = vmatprep.subr.mxu0 0.0
    %95 = vmatpush1.msra.mxu0 0.0
    %96 = vmatprep.subr.mxu0 0.0
    %97 = vmatpush1.msra.mxu0 0.0
    %98 = vmatprep.subr.mxu0 0.0
    %99 = vmatpush1.msra.mxu0 0.0
    %100 = vmatprep.subr.mxu0 0.0
    %101 = vmatpush1.msra.mxu0 0.0
    %102 = vmatprep.subr.mxu0 0.0
    %103 = vmatpush1.msra.mxu0 0.0
    %104 = vmatprep.subr.mxu0 0.0
    %105 = vmatpush1.msra.mxu0 0.0
    %106 = vmatprep.subr.mxu0 0.0
    %107 = vmatpush1.msra.mxu0 0.0
    %108 = vmatprep.subr.mxu0 0.0
    %109 = vmatpush1.msra.mxu0 0.0
    %110 = vmatprep.subr.mxu0 0.0
    %111 = vmatpush1.msra.mxu0 0.0
    %112 = vmatprep.mubr.f32.mxu0 0.0
    %113 = vmatmul.mubr.f32.gmra.mrb[0].mxu0 %v42
    %v114 = vpop.f32.mrb[0].mxu0
    %v115 = vadd.f32 %v38, %v114
    %v116 = vpop.f32.mrb[0].mxu0
    %117 = vdwg.mxu0
    %v118 = vmax.f32 %v115, 0.0
    %v119 = vld [vmem:[#allocation2] sm:$0xff]
    %v120 = vld [vmem:[#allocation2 + $0x8] sm:$0xff]
    %v121 = vld [vmem:[#allocation2 + $0x10] sm:$0xff]
    %v122 = vld [vmem:[#allocation2 + $0x18] sm:$0xff]
    %v123 = vld [vmem:[#allocation2 + $0x20] sm:$0xff]
    %v124 = vld [vmem:[#allocation2 + $0x28] sm:$0xff]
    %v125 = vld [vmem:[#allocation2 + $0x30] sm:$0xff]
    %v126 = vld [vmem:[#allocation2 + $0x38] sm:$0xff]
    %v127 = vld [vmem:[#allocation2 + $0x40] sm:$0xff]
    %v128 = vld [vmem:[#allocation2 + $0x48] sm:$0xff]
    %v129 = vld [vmem:[#allocation2 + $0x50] sm:$0xff]
    %v130 = vld [vmem:[#allocation2 + $0x58] sm:$0xff]
    %v131 = vld [vmem:[#allocation2 + $0x60] sm:$0xff]
    %v132 = vld [vmem:[#allocation2 + $0x68] sm:$0xff]
    %v133 = vld [vmem:[#allocation2 + $0x70] sm:$0xff]
    %v134 = vld [vmem:[#allocation2 + $0x78] sm:$0xff]
    %s135 = scalar_lea.vmem %s3, 1
    %v136 = vld [vmem:[%s135] sm:$0x1]
    %v138 = vlaneseq
    %v139 = vshrl.u32 %v138, 7
    %v140 = vsub.s32 0, %v139
    %v141 = vrot.slane %v136, %v140
    %143 = vmatprep.subr.mxu0 0.0
    %144 = vmatpush1.msra.mxu0 %v119
    %145 = vmatprep.subr.mxu0 0.0
    %146 = vmatpush1.msra.mxu0 %v120
    %147 = vmatprep.subr.mxu0 0.0
    %148 = vmatpush1.msra.mxu0 %v121
    %149 = vmatprep.subr.mxu0 0.0
    %150 = vmatpush1.msra.mxu0 %v122
    %151 = vmatprep.subr.mxu0 0.0
    %152 = vmatpush1.msra.mxu0 %v123
    %153 = vmatprep.subr.mxu0 0.0
    %154 = vmatpush1.msra.mxu0 %v124
    %155 = vmatprep.subr.mxu0 0.0
    %156 = vmatpush1.msra.mxu0 %v125
    %157 = vmatprep.subr.mxu0 0.0
    %158 = vmatpush1.msra.mxu0 %v126
    %159 = vmatprep.subr.mxu0 0.0
    %160 = vmatpush1.msra.mxu0 %v127
    %161 = vmatprep.subr.mxu0 0.0
    %162 = vmatpush1.msra.mxu0 %v128
    %163 = vmatprep.subr.mxu0 0.0
    %164 = vmatpush1.msra.mxu0 %v129
    %165 = vmatprep.subr.mxu0 0.0
    %166 = vmatpush1.msra.mxu0 %v130
    %167 = vmatprep.subr.mxu0 0.0
    %168 = vmatpush1.msra.mxu0 %v131
    %169 = vmatprep.subr.mxu0 0.0
    %170 = vmatpush1.msra.mxu0 %v132
    %171 = vmatprep.subr.mxu0 0.0
    %172 = vmatpush1.msra.mxu0 %v133
    %173 = vmatprep.subr.mxu0 0.0
    %174 = vmatpush1.msra.mxu0 %v134
    %175 = vmatprep.subr.mxu0 0.0
    %176 = vmatpush1.msra.mxu0 0.0
    %177 = vmatprep.subr.mxu0 0.0
    %178 = vmatpush1.msra.mxu0 0.0
    %179 = vmatprep.subr.mxu0 0.0
    %180 = vmatpush1.msra.mxu0 0.0
    %181 = vmatprep.subr.mxu0 0.0
    %182 = vmatpush1.msra.mxu0 0.0
    %183 = vmatprep.subr.mxu0 0.0
    %184 = vmatpush1.msra.mxu0 0.0
    %185 = vmatprep.subr.mxu0 0.0
    %186 = vmatpush1.msra.mxu0 0.0
    %187 = vmatprep.subr.mxu0 0.0
    %188 = vmatpush1.msra.mxu0 0.0
    %189 = vmatprep.subr.mxu0 0.0
    %190 = vmatpush1.msra.mxu0 0.0
    %191 = vmatprep.subr.mxu0 0.0
    %192 = vmatpush1.msra.mxu0 0.0
    %193 = vmatprep.subr.mxu0 0.0
    %194 = vmatpush1.msra.mxu0 0.0
    %195 = vmatprep.subr.mxu0 0.0
    %196 = vmatpush1.msra.mxu0 0.0
    %197 = vmatprep.subr.mxu0 0.0
    %198 = vmatpush1.msra.mxu0 0.0
    %199 = vmatprep.subr.mxu0 0.0
    %200 = vmatpush1.msra.mxu0 0.0
    %201 = vmatprep.subr.mxu0 0.0
    %202 = vmatpush1.msra.mxu0 0.0
    %203 = vmatprep.subr.mxu0 0.0
    %204 = vmatpush1.msra.mxu0 0.0
    %205 = vmatprep.subr.mxu0 0.0
    %206 = vmatpush1.msra.mxu0 0.0
    %207 = vmatprep.mubr.f32.mxu0 0.0
    %208 = vmatmul.mubr.f32.gmra.mrb[0].mxu0 %v118
    %v209 = vpop.f32.mrb[0].mxu0
    %v210 = vadd.f32 %v141, %v209
    %v211 = vpop.f32.mrb[0].mxu0
    %212 = vdwg.mxu0
    %v213 = vmax.f32 %v210, 0.0
    %s214 = scalar_lea.vmem [#allocation2], 128
    %v215 = vld [vmem:[%s214] sm:$0xff]
    %v216 = vld [vmem:[%s214 + $0x8] sm:$0xff]
    %v217 = vld [vmem:[%s214 + $0x10] sm:$0xff]
    %v218 = vld [vmem:[%s214 + $0x18] sm:$0xff]
    %v219 = vld [vmem:[%s214 + $0x20] sm:$0xff]
    %v220 = vld [vmem:[%s214 + $0x28] sm:$0xff]
    %v221 = vld [vmem:[%s214 + $0x30] sm:$0xff]
    %v222 = vld [vmem:[%s214 + $0x38] sm:$0xff]
    %v223 = vld [vmem:[%s214 + $0x40] sm:$0xff]
    %v224 = vld [vmem:[%s214 + $0x48] sm:$0xff]
    %v225 = vld [vmem:[%s214 + $0x50] sm:$0xff]
    %v226 = vld [vmem:[%s214 + $0x58] sm:$0xff]
    %v227 = vld [vmem:[%s214 + $0x60] sm:$0xff]
    %v228 = vld [vmem:[%s214 + $0x68] sm:$0xff]
    %v229 = vld [vmem:[%s214 + $0x70] sm:$0xff]
    %v230 = vld [vmem:[%s214 + $0x78] sm:$0xff]
    %s231 = scalar_lea.vmem %s3, 2
    %v232 = vld [vmem:[%s231] sm:$0x1]
    %v234 = vlaneseq
    %v235 = vshrl.u32 %v234, 7
    %v236 = vsub.s32 0, %v235
    %v237 = vrot.slane %v232, %v236
    %239 = vmatprep.subr.mxu0 0.0
    %240 = vmatpush1.msra.mxu0 %v215
    %241 = vmatprep.subr.mxu0 0.0
    %242 = vmatpush1.msra.mxu0 %v216
    %243 = vmatprep.subr.mxu0 0.0
    %244 = vmatpush1.msra.mxu0 %v217
    %245 = vmatprep.subr.mxu0 0.0
    %246 = vmatpush1.msra.mxu0 %v218
    %247 = vmatprep.subr.mxu0 0.0
    %248 = vmatpush1.msra.mxu0 %v219
    %249 = vmatprep.subr.mxu0 0.0
    %250 = vmatpush1.msra.mxu0 %v220
    %251 = vmatprep.subr.mxu0 0.0
    %252 = vmatpush1.msra.mxu0 %v221
    %253 = vmatprep.subr.mxu0 0.0
    %254 = vmatpush1.msra.mxu0 %v222
    %255 = vmatprep.subr.mxu0 0.0
    %256 = vmatpush1.msra.mxu0 %v223
    %257 = vmatprep.subr.mxu0 0.0
    %258 = vmatpush1.msra.mxu0 %v224
    %259 = vmatprep.subr.mxu0 0.0
    %260 = vmatpush1.msra.mxu0 %v225
    %261 = vmatprep.subr.mxu0 0.0
    %262 = vmatpush1.msra.mxu0 %v226
    %263 = vmatprep.subr.mxu0 0.0
    %264 = vmatpush1.msra.mxu0 %v227
    %265 = vmatprep.subr.mxu0 0.0
    %266 = vmatpush1.msra.mxu0 %v228
    %267 = vmatprep.subr.mxu0 0.0
    %268 = vmatpush1.msra.mxu0 %v229
    %269 = vmatprep.subr.mxu0 0.0
    %270 = vmatpush1.msra.mxu0 %v230
    %271 = vmatprep.subr.mxu0 0.0
    %272 = vmatpush1.msra.mxu0 0.0
    %273 = vmatprep.subr.mxu0 0.0
    %274 = vmatpush1.msra.mxu0 0.0
    %275 = vmatprep.subr.mxu0 0.0
    %276 = vmatpush1.msra.mxu0 0.0
    %277 = vmatprep.subr.mxu0 0.0
    %278 = vmatpush1.msra.mxu0 0.0
    %279 = vmatprep.subr.mxu0 0.0
    %280 = vmatpush1.msra.mxu0 0.0
    %281 = vmatprep.subr.mxu0 0.0
    %282 = vmatpush1.msra.mxu0 0.0
    %283 = vmatprep.subr.mxu0 0.0
    %284 = vmatpush1.msra.mxu0 0.0
    %285 = vmatprep.subr.mxu0 0.0
    %286 = vmatpush1.msra.mxu0 0.0
    %287 = vmatprep.subr.mxu0 0.0
    %288 = vmatpush1.msra.mxu0 0.0
    %289 = vmatprep.subr.mxu0 0.0
    %290 = vmatpush1.msra.mxu0 0.0
    %291 = vmatprep.subr.mxu0 0.0
    %292 = vmatpush1.msra.mxu0 0.0
    %293 = vmatprep.subr.mxu0 0.0
    %294 = vmatpush1.msra.mxu0 0.0
    %295 = vmatprep.subr.mxu0 0.0
    %296 = vmatpush1.msra.mxu0 0.0
    %297 = vmatprep.subr.mxu0 0.0
    %298 = vmatpush1.msra.mxu0 0.0
    %299 = vmatprep.subr.mxu0 0.0
    %300 = vmatpush1.msra.mxu0 0.0
    %301 = vmatprep.subr.mxu0 0.0
    %302 = vmatpush1.msra.mxu0 0.0
    %303 = vmatprep.mubr.f32.mxu0 0.0
    %304 = vmatmul.mubr.f32.gmra.mrb[0].mxu0 %v213
    %v305 = vpop.f32.mrb[0].mxu0
    %v306 = vadd.f32 %v237, %v305
    %v307 = vpop.f32.mrb[0].mxu0
    %308 = vdwg.mxu0
    %309 = vst [vmem:[%s4] sm:$0xff] %v306
    // Predicated region
    $region22: #{fwd.1} parent=1 // pred_check
      _
    $region23: #{fwd.1} parent=1 // pred_check_branch
      %311 = sbr.rel (0) target = $region25
    $region24: #{fwd.1} parent=1 // pred_region
      _
    $region25: #{fwd.1} parent=1 // pred_fallthru
      _
    // Predicated region
    $region26: #{fwd.1} parent=1 // pred_check
      _
    $region27: #{fwd.1} parent=1 // pred_check_branch
      %313 = sbr.rel (0) target = $region29
    $region28: #{fwd.1} parent=1 // pred_region
      _
    $region29: #{fwd.1} parent=1 // pred_fallthru
      _
    %314 = vsyncpa [#allocation3], 1

</llo_original>
